<compile_context>
chip_gen: v7x
topology: tpu7x:2x2x1
jax: 0.10.0
libtpu: 0.0.40
codegen_flags: <defaults>
</compile_context>

<pallas_src>
import functools

import jax
import jax.numpy as jnp
from jax.experimental import pallas as pl
from jax.experimental.pallas import tpu as pltpu

BN_EPS = 1e-5  # nn.BatchNorm1d default
LANE = 128


def _round_up(n, m):
    return ((n + m - 1) // m) * m


def _pad_last(a, target):
    pad = target - a.shape[-1]
    if pad == 0:
        return a
    widths = [(0, 0)] * (a.ndim - 1) + [(0, pad)]
    return jnp.pad(a, widths)


def mlp_kernel(x_ref, w0_ref, ws_ref, aff_ref, o_ref, *, num_extra, inv_batch):
    # First Linear.  Its bias is dropped: the following training-mode BatchNorm
    # subtracts the batch mean, so any per-channel constant cancels exactly.
    h = jnp.dot(x_ref[...], w0_ref[...], preferred_element_type=jnp.float32)
    Dp = h.shape[-1]

    # Static (unrolled) loop over the repeated [BN -> ReLU -> Linear] blocks.
    for l in range(num_extra):
        # One fused sublane reduction for BOTH batch statistics: [sum(h) | sum(h*h)].
        hh = jnp.concatenate([h, h * h], axis=-1)                  # (B, 2*Dp)
        s = jnp.sum(hh, axis=0, keepdims=True) * inv_batch         # (1, 2*Dp)
        mean = s[:, :Dp]
        ex2 = s[:, Dp:]
        var = jnp.maximum(ex2 - mean * mean, 0.0)
        # BN affine folded into a single FMA.  Padded channels have gamma==0 so
        # they stay exactly zero through BN / ReLU / the zero-padded weights.
        scale = aff_ref[2 * l:2 * l + 1, :] * jax.lax.rsqrt(var + BN_EPS)
        shift = aff_ref[2 * l + 1:2 * l + 2, :] - mean * scale
        h = jnp.maximum(h * scale + shift, 0.0)                    # BN + ReLU
        # Linear(D, D): bf16 operands into the MXU, f32 accumulation.
        # Intermediate biases are dropped (cancel in the next BN).
        h = jnp.dot(h.astype(jnp.bfloat16), ws_ref[l],
                    preferred_element_type=jnp.float32)

    # Only the final layer's bias survives (no BN after it).
    h = h + aff_ref[2 * num_extra:2 * num_extra + 1, :]
    o_ref[...] = h.astype(o_ref.dtype)


def prepare_mlp_params(w0, b0, gammas, betas, ws, bs):
    """Pad / cast parameters ONCE at init.  Keep the results for the hot path."""
    F, D = w0.shape
    num_extra = ws.shape[0]
    assert num_extra >= 1, "encoder_num_layers must be >= 2 for this kernel"
    Fp = _round_up(F, LANE)
    Dp = _round_up(D, LANE)

    w0_p = jnp.pad(w0, ((0, Fp - F), (0, Dp - D))).astype(jnp.bfloat16)
    ws_p = jnp.pad(ws, ((0, 0), (0, Dp - D), (0, Dp - D))).astype(jnp.bfloat16)

    # Single stacked f32 operand: rows [2l] = gamma_l, [2l+1] = beta_l,
    # last row = final Linear bias.  (b0 and intermediate biases are dropped:
    # they cancel exactly in training-mode BatchNorm.)
    rows = []
    for l in range(num_extra):
        rows.append(gammas[l])
        rows.append(betas[l])
    rows.append(bs[num_extra - 1])
    aff = _pad_last(jnp.stack(rows, axis=0), Dp).astype(jnp.float32)

    return w0_p, ws_p, aff


@functools.partial(jax.jit, static_argnames=("out_dim",))
def mlp_forward(x, w0_p, ws_p, aff, *, out_dim):
    """Fused MLP forward.  Only x is padded/cast per call; params are pre-prepared."""
    B, _ = x.shape
    Fp, Dp = w0_p.shape
    num_extra = ws_p.shape[0]

    x_p = _pad_last(x, Fp).astype(jnp.bfloat16)

    flops = 2 * B * (Fp * Dp + num_extra * Dp * Dp)
    transcendentals = num_extra * Dp  # one rsqrt lane-row per BN layer
    bytes_accessed = (x_p.size * 2 + w0_p.size * 2 + ws_p.size * 2
                      + aff.size * 4 + B * Dp * 4)

    kernel = functools.partial(mlp_kernel, num_extra=num_extra, inv_batch=1.0 / B)
    # Whole problem is tiny -> single grid point, every operand fully VMEM-resident.
    out = pl.pallas_call(
        kernel,
        out_shape=jax.ShapeDtypeStruct((B, Dp), jnp.float32),
        in_specs=[pl.BlockSpec(memory_space=pltpu.MemorySpace.VMEM)] * 4,
        out_specs=pl.BlockSpec(memory_space=pltpu.MemorySpace.VMEM),
        cost_estimate=pl.CostEstimate(flops=flops,
                                      transcendentals=transcendentals,
                                      bytes_accessed=bytes_accessed),
    )(x_p, w0_p, ws_p, aff)

    return out[:, :out_dim]


def mlp_reference(x, w0, b0, gammas, betas, ws, bs):
    """Pure-JAX f32 reference mirroring the PyTorch forward (training-mode BN),
    including ALL biases (verifies the bias-drop algebra is exact)."""
    h = x @ w0 + b0
    for l in range(ws.shape[0]):
        mean = jnp.mean(h, axis=0, keepdims=True)
        var = jnp.mean((h - mean) ** 2, axis=0, keepdims=True)
        h = (h - mean) / jnp.sqrt(var + BN_EPS)
        h = h * gammas[l:l + 1, :] + betas[l:l + 1, :]
        h = jnp.maximum(h, 0.0)
        h = h @ ws[l] + bs[l:l + 1, :]
    return h


if __name__ == "__main__":
    # args: input_size=16, embedding_dim=32, encoder_num_layers=3, init_strat='normal'
    batch = 8
    input_size = 16
    embedding_dim = 32
    encoder_num_layers = 3
    num_extra = encoder_num_layers - 1

    key = jax.random.PRNGKey(0)
    kx, kw0, kws = jax.random.split(key, 3)

    # Deterministic init matching init_strat='normal': W ~ N(0, 0.001), bias = 0.
    x = jax.random.normal(kx, (batch, input_size), dtype=jnp.float32)
    w0 = 0.001 * jax.random.normal(kw0, (input_size, embedding_dim), dtype=jnp.float32)
    b0 = jnp.zeros((1, embedding_dim), dtype=jnp.float32)
    ws = 0.001 * jax.random.normal(kws, (num_extra, embedding_dim, embedding_dim),
                                   dtype=jnp.float32)
    bs = jnp.zeros((num_extra, embedding_dim), dtype=jnp.float32)
    # BatchNorm1d defaults: weight (gamma) = 1, bias (beta) = 0.
    gammas = jnp.ones((num_extra, embedding_dim), dtype=jnp.float32)
    betas = jnp.zeros((num_extra, embedding_dim), dtype=jnp.float32)

    # Init-time parameter preparation (padding / casting happens exactly once).
    w0_p, ws_p, aff = prepare_mlp_params(w0, b0, gammas, betas, ws, bs)
    w0_p, ws_p, aff = jax.block_until_ready((w0_p, ws_p, aff))

    out = mlp_forward(x, w0_p, ws_p, aff, out_dim=embedding_dim)
    out = jax.block_until_ready(out)

    ref = mlp_reference(x, w0, b0, gammas, betas, ws, bs)
    assert out.shape == (batch, embedding_dim)
    # bf16 matmul operands (f32 accumulate) -> slightly relaxed tolerance vs f32 ref.
    assert jnp.allclose(out, ref, atol=1e-3, rtol=5e-2), "mismatch vs JAX reference"

    print("KERNEL_OK")
</pallas_src>

<mosaic_0001>
module attributes {stable_mosaic.version = 11 : i64} {
  func.func @mlp_kernel(%arg0: memref<8x128xbf16, #tpu.memory_space<vmem>>, %arg1: memref<128x128xbf16, #tpu.memory_space<vmem>>, %arg2: memref<2x128x128xbf16, #tpu.memory_space<vmem>>, %arg3: memref<5x128xf32, #tpu.memory_space<vmem>>, %arg4: memref<8x128xf32, #tpu.memory_space<vmem>>) attributes {dimension_semantics = [], scalar_prefetch = 0 : i64, scratch_operands = 0 : i64, tpu.core_type = #tpu.core_type<tc>} {
    %c0 = arith.constant 0 : index
    %c0_0 = arith.constant 0 : index
    %0 = vector.load %arg0[%c0, %c0_0] : memref<8x128xbf16, #tpu.memory_space<vmem>>, vector<8x128xbf16>
    %c0_1 = arith.constant 0 : index
    %c0_2 = arith.constant 0 : index
    %1 = vector.load %arg1[%c0_1, %c0_2] : memref<128x128xbf16, #tpu.memory_space<vmem>>, vector<128x128xbf16>
    %cst = arith.constant dense<0.000000e+00> : vector<8x128xf32>
    %2 = tpu.matmul %0, %1, %cst {dimension_numbers = #tpu.dot_dimension_numbers<[1], [0], [0], [1], [0, 0, 1, 1], [], []>} : vector<8x128xbf16>, vector<128x128xbf16>, vector<8x128xf32> -> vector<8x128xf32>
    %3 = arith.mulf %2, %2 : vector<8x128xf32>
    %4 = tpu.concatenate %2, %3 in 1 : vector<8x128xf32>, vector<8x128xf32> -> vector<8x256xf32>
    %cst_3 = arith.constant dense<0.000000e+00> : vector<256xf32>
    %5 = vector.multi_reduction <add>, %4, %cst_3 [0] : vector<8x256xf32> to vector<256xf32>
    %6 = vector.shape_cast %5 : vector<256xf32> to vector<1x256xf32>
    %cst_4 = arith.constant 1.250000e-01 : f32
    %7 = vector.broadcast %cst_4 : f32 to vector<1x256xf32>
    %8 = arith.mulf %6, %7 : vector<1x256xf32>
    %9 = vector.extract_strided_slice %8 {offsets = [0, 0], sizes = [1, 128], strides = [1, 1]} : vector<1x256xf32> to vector<1x128xf32>
    %10 = vector.extract_strided_slice %8 {offsets = [0, 128], sizes = [1, 128], strides = [1, 1]} : vector<1x256xf32> to vector<1x128xf32>
    %11 = arith.mulf %9, %9 : vector<1x128xf32>
    %12 = arith.subf %10, %11 : vector<1x128xf32>
    %cst_5 = arith.constant 0.000000e+00 : f32
    %13 = vector.broadcast %cst_5 : f32 to vector<1x128xf32>
    %14 = arith.maximumf %12, %13 : vector<1x128xf32>
    %c0_6 = arith.constant 0 : index
    %c0_7 = arith.constant 0 : index
    %15 = vector.load %arg3[%c0_6, %c0_7] : memref<5x128xf32, #tpu.memory_space<vmem>>, vector<1x128xf32>
    %cst_8 = arith.constant 9.99999974E-6 : f32
    %16 = vector.broadcast %cst_8 : f32 to vector<1x128xf32>
    %17 = arith.addf %14, %16 : vector<1x128xf32>
    %18 = math.rsqrt %17 : vector<1x128xf32>
    %19 = arith.mulf %15, %18 : vector<1x128xf32>
    %c1 = arith.constant 1 : index
    %c0_9 = arith.constant 0 : index
    %20 = vector.load %arg3[%c1, %c0_9] : memref<5x128xf32, #tpu.memory_space<vmem>>, vector<1x128xf32>
    %21 = arith.mulf %9, %19 : vector<1x128xf32>
    %22 = arith.subf %20, %21 : vector<1x128xf32>
    %23 = vector.broadcast %19 : vector<1x128xf32> to vector<8x128xf32>
    %24 = arith.mulf %2, %23 : vector<8x128xf32>
    %25 = vector.broadcast %22 : vector<1x128xf32> to vector<8x128xf32>
    %26 = arith.addf %24, %25 : vector<8x128xf32>
    %cst_10 = arith.constant 0.000000e+00 : f32
    %27 = vector.broadcast %cst_10 : f32 to vector<8x128xf32>
    %28 = arith.maximumf %26, %27 : vector<8x128xf32>
    %29 = arith.truncf %28 : vector<8x128xf32> to vector<8x128xbf16>
    %c0_11 = arith.constant 0 : index
    %c0_12 = arith.constant 0 : index
    %c0_13 = arith.constant 0 : index
    %30 = vector.load %arg2[%c0_11, %c0_12, %c0_13] : memref<2x128x128xbf16, #tpu.memory_space<vmem>>, vector<1x128x128xbf16>
    %31 = vector.shape_cast %30 : vector<1x128x128xbf16> to vector<128x128xbf16>
    %cst_14 = arith.constant dense<0.000000e+00> : vector<8x128xf32>
    %32 = tpu.matmul %29, %31, %cst_14 {dimension_numbers = #tpu.dot_dimension_numbers<[1], [0], [0], [1], [0, 0, 1, 1], [], []>} : vector<8x128xbf16>, vector<128x128xbf16>, vector<8x128xf32> -> vector<8x128xf32>
    %33 = arith.mulf %32, %32 : vector<8x128xf32>
    %34 = tpu.concatenate %32, %33 in 1 : vector<8x128xf32>, vector<8x128xf32> -> vector<8x256xf32>
    %cst_15 = arith.constant dense<0.000000e+00> : vector<256xf32>
    %35 = vector.multi_reduction <add>, %34, %cst_15 [0] : vector<8x256xf32> to vector<256xf32>
    %36 = vector.shape_cast %35 : vector<256xf32> to vector<1x256xf32>
    %cst_16 = arith.constant 1.250000e-01 : f32
    %37 = vector.broadcast %cst_16 : f32 to vector<1x256xf32>
    %38 = arith.mulf %36, %37 : vector<1x256xf32>
    %39 = vector.extract_strided_slice %38 {offsets = [0, 0], sizes = [1, 128], strides = [1, 1]} : vector<1x256xf32> to vector<1x128xf32>
    %40 = vector.extract_strided_slice %38 {offsets = [0, 128], sizes = [1, 128], strides = [1, 1]} : vector<1x256xf32> to vector<1x128xf32>
    %41 = arith.mulf %39, %39 : vector<1x128xf32>
    %42 = arith.subf %40, %41 : vector<1x128xf32>
    %cst_17 = arith.constant 0.000000e+00 : f32
    %43 = vector.broadcast %cst_17 : f32 to vector<1x128xf32>
    %44 = arith.maximumf %42, %43 : vector<1x128xf32>
    %c2 = arith.constant 2 : index
    %c0_18 = arith.constant 0 : index
    %45 = vector.load %arg3[%c2, %c0_18] : memref<5x128xf32, #tpu.memory_space<vmem>>, vector<1x128xf32>
    %cst_19 = arith.constant 9.99999974E-6 : f32
    %46 = vector.broadcast %cst_19 : f32 to vector<1x128xf32>
    %47 = arith.addf %44, %46 : vector<1x128xf32>
    %48 = math.rsqrt %47 : vector<1x128xf32>
    %49 = arith.mulf %45, %48 : vector<1x128xf32>
    %c3 = arith.constant 3 : index
    %c0_20 = arith.constant 0 : index
    %50 = vector.load %arg3[%c3, %c0_20] : memref<5x128xf32, #tpu.memory_space<vmem>>, vector<1x128xf32>
    %51 = arith.mulf %39, %49 : vector<1x128xf32>
    %52 = arith.subf %50, %51 : vector<1x128xf32>
    %53 = vector.broadcast %49 : vector<1x128xf32> to vector<8x128xf32>
    %54 = arith.mulf %32, %53 : vector<8x128xf32>
    %55 = vector.broadcast %52 : vector<1x128xf32> to vector<8x128xf32>
    %56 = arith.addf %54, %55 : vector<8x128xf32>
    %cst_21 = arith.constant 0.000000e+00 : f32
    %57 = vector.broadcast %cst_21 : f32 to vector<8x128xf32>
    %58 = arith.maximumf %56, %57 : vector<8x128xf32>
    %59 = arith.truncf %58 : vector<8x128xf32> to vector<8x128xbf16>
    %c1_22 = arith.constant 1 : index
    %c0_23 = arith.constant 0 : index
    %c0_24 = arith.constant 0 : index
    %60 = vector.load %arg2[%c1_22, %c0_23, %c0_24] : memref<2x128x128xbf16, #tpu.memory_space<vmem>>, vector<1x128x128xbf16>
    %61 = vector.shape_cast %60 : vector<1x128x128xbf16> to vector<128x128xbf16>
    %cst_25 = arith.constant dense<0.000000e+00> : vector<8x128xf32>
    %62 = tpu.matmul %59, %61, %cst_25 {dimension_numbers = #tpu.dot_dimension_numbers<[1], [0], [0], [1], [0, 0, 1, 1], [], []>} : vector<8x128xbf16>, vector<128x128xbf16>, vector<8x128xf32> -> vector<8x128xf32>
    %c4 = arith.constant 4 : index
    %c0_26 = arith.constant 0 : index
    %63 = vector.load %arg3[%c4, %c0_26] : memref<5x128xf32, #tpu.memory_space<vmem>>, vector<1x128xf32>
    %64 = vector.broadcast %63 : vector<1x128xf32> to vector<8x128xf32>
    %65 = arith.addf %62, %64 : vector<8x128xf32>
    %c0_27 = arith.constant 0 : index
    %c0_28 = arith.constant 0 : index
    %66 = vector.load %arg4[%c0_27, %c0_28] : memref<8x128xf32, #tpu.memory_space<vmem>>, vector<8x128xf32>
    tpu.vector_store %arg4[%c0_27, %c0_28], %65 {strides = array<i32>} : memref<8x128xf32, #tpu.memory_space<vmem>>, vector<8x128xf32>,
    return
  }
}

</mosaic_0001>

<llo_original>
// kernel: mlp_forward.1
$region0: #{mlp_forward.1}
  #allocation0 [shape = 'u32[]', space=smem, size = 0x4, offset = 0x4, fixed_abs, tag = 'smem constant byte address 0x4 - core index']
  #allocation1 [shape = 'u32[144,128]{1,0:T(1,128)}', space=vmem, size = 0x12000, scoped, tag = 'internal scratch']
  %s0 = inlined_call_operand.vmem [shape: bf16[8,128], index: 0, kind: input, shape index: {}]
  %s1 = inlined_call_operand.hbm [shape: bf16[128,128], index: 1, kind: input, shape index: {}]
  %s2 = inlined_call_operand.hbm [shape: bf16[2,128,128], index: 2, kind: input, shape index: {}]
  %s3 = inlined_call_operand.vmem [shape: f32[5,128], index: 3, kind: input, shape index: {}]
  %s4 = inlined_call_operand.hbm [shape: f32[8,128], index: 4, kind: output, shape index: {}]
  %s5 = sld [smem:[#allocation0]]
  $region34: #{mlp_forward.1} parent=0
    _
  %s7 = ssub.s32 1, %s5
  %s8 = scalar_select 0, %s7, %s5
  $region1: #{mlp_forward.1} parent=0
    #allocation2 [shape = 'u8[32768]{0}', space=vmem, size = 0x8000, scoped, tag = 'input window, operand 1, single buffered']
    #allocation3 [shape = 's32[1]{0}', space=sflag, size = 0x4, scoped, tag = 'scoped memory for mlp_forward.1']
    #allocation4 [shape = 's32[1]{0}', space=sflag, size = 0x4, scoped, tag = 'scoped memory for mlp_forward.1']
    #allocation5 [shape = 'u8[65536]{0}', space=vmem, size = 0x10000, scoped, tag = 'input window, operand 2, single buffered']
    #allocation6 [shape = 's32[1]{0}', space=sflag, size = 0x4, scoped, tag = 'scoped memory for mlp_forward.1']
    #allocation7 [shape = 'u8[4096]{0}', space=vmem, size = 0x1000, scoped, tag = 'output window, operand 0, single buffered']
    %9 = vsyncpa [#allocation3], 0
    %10 = vsyncpa [#allocation6], 0
    %11 = vsyncpa [#allocation4], 0
    // Predicated region
    $region2: #{mlp_forward.1} parent=1 // pred_check
      _
    $region3: #{mlp_forward.1} parent=1 // pred_check_branch
      %13 = sbr.rel (0) target = $region5
    $region4: #{mlp_forward.1} parent=1 // pred_region
      _
    $region5: #{mlp_forward.1} parent=1 // pred_fallthru
      _
    // Predicated region
    $region6: #{mlp_forward.1} parent=1 // pred_check
      _
    $region7: #{mlp_forward.1} parent=1 // pred_check_branch
      %15 = sbr.rel (0) target = $region9
    $region8: #{mlp_forward.1} parent=1 // pred_region
      %s17 = ssub.s32 1024, 1024
      %18 = vsyncadd [#allocation3], %s17
      %s19 = sshll.u32 [#allocation2], 4
      %s20 = int_to_ptr.vmem [resolvable:$true] %s19
      %25 = dma.hbm_to_vmem [thread:$0]  %s1, 1024, %s20, [#allocation3], 64, 64, 4
    $region9: #{mlp_forward.1} parent=1 // pred_fallthru
      _
    // Predicated region
    $region10: #{mlp_forward.1} parent=1 // pred_check
      _
    $region11: #{mlp_forward.1} parent=1 // pred_check_branch
      %27 = sbr.rel (0) target = $region13
    $region12: #{mlp_forward.1} parent=1 // pred_region
      %s29 = ssub.s32 2048, 2048
      %30 = vsyncadd [#allocation6], %s29
      %s31 = sshll.u32 [#allocation5], 4
      %s32 = int_to_ptr.vmem [resolvable:$true] %s31
      %37 = dma.hbm_to_vmem [thread:$0]  %s2, 2048, %s32, [#allocation6], 64, 64, 4
    $region13: #{mlp_forward.1} parent=1 // pred_fallthru
      _
    // Predicated region
    $region14: #{mlp_forward.1} parent=1 // pred_check
      _
    $region15: #{mlp_forward.1} parent=1 // pred_check_branch
      %39 = sbr.rel (0) target = $region17
    $region16: #{mlp_forward.1} parent=1 // pred_region
      _
    $region17: #{mlp_forward.1} parent=1 // pred_fallthru
      _
    // Predicated region
    $region18: #{mlp_forward.1} parent=1 // pred_check
      _
    $region19: #{mlp_forward.1} parent=1 // pred_check_branch
      %41 = sbr.rel (0) target = $region21
    $region20: #{mlp_forward.1} parent=1 // pred_region
      %42 = dma.done [#allocation3], 1024
    $region21: #{mlp_forward.1} parent=1 // pred_fallthru
      _
    // Predicated region
    $region22: #{mlp_forward.1} parent=1 // pred_check
      _
    $region23: #{mlp_forward.1} parent=1 // pred_check_branch
      %44 = sbr.rel (0) target = $region25
    $region24: #{mlp_forward.1} parent=1 // pred_region
      %45 = dma.done [#allocation6], 2048
    $region25: #{mlp_forward.1} parent=1 // pred_fallthru
      _
    %v47 = vld [vmem:[%s0] sm:$0xf]
    %v48 = vld [vmem:[#allocation2] sm:$0xf]
    %v49 = vld [vmem:[#allocation2 + $0x4] sm:$0xf]
    %v50 = vld [vmem:[#allocation2 + $0x8] sm:$0xf]
    %v51 = vld [vmem:[#allocation2 + $0xc] sm:$0xf]
    %v52 = vld [vmem:[#allocation2 + $0x10] sm:$0xf]
    %v53 = vld [vmem:[#allocation2 + $0x14] sm:$0xf]
    %v54 = vld [vmem:[#allocation2 + $0x18] sm:$0xf]
    %v55 = vld [vmem:[#allocation2 + $0x1c] sm:$0xf]
    %v56 = vld [vmem:[#allocation2 + $0x20] sm:$0xf]
    %v57 = vld [vmem:[#allocation2 + $0x24] sm:$0xf]
    %v58 = vld [vmem:[#allocation2 + $0x28] sm:$0xf]
    %v59 = vld [vmem:[#allocation2 + $0x2c] sm:$0xf]
    %v60 = vld [vmem:[#allocation2 + $0x30] sm:$0xf]
    %v61 = vld [vmem:[#allocation2 + $0x34] sm:$0xf]
    %v62 = vld [vmem:[#allocation2 + $0x38] sm:$0xf]
    %v63 = vld [vmem:[#allocation2 + $0x3c] sm:$0xf]
    %v80 = vunpack.c.l.b16 %v48
    %v81 = vunpack.c.l.b16 %v49
    %v82 = vunpack.c.l.b16 %v50
    %v83 = vunpack.c.l.b16 %v51
    %v84 = vunpack.c.l.b16 %v52
    %v85 = vunpack.c.l.b16 %v53
    %v86 = vunpack.c.l.b16 %v54
    %v87 = vunpack.c.l.b16 %v55
    %v88 = vunpack.c.l.b16 %v56
    %v89 = vunpack.c.l.b16 %v57
    %v90 = vunpack.c.l.b16 %v58
    %v91 = vunpack.c.l.b16 %v59
    %v92 = vunpack.c.l.b16 %v60
    %v93 = vunpack.c.l.b16 %v61
    %v94 = vunpack.c.l.b16 %v62
    %v95 = vunpack.c.l.b16 %v63
    %v96 = vpack.c.b16 %v81, %v80
    %v97 = vpack.c.b16 %v83, %v82
    %v98 = vpack.c.b16 %v85, %v84
    %v99 = vpack.c.b16 %v87, %v86
    %v100 = vpack.c.b16 %v89, %v88
    %v101 = vpack.c.b16 %v91, %v90
    %v102 = vpack.c.b16 %v93, %v92
    %v103 = vpack.c.b16 %v95, %v94
    %112 = vmatprep.subr.bf16.mxu0 0
    %113 = vmatpush1.bf16.msra.mxu0 %v96
    %114 = vmatprep.subr.bf16.mxu0 0
    %115 = vmatpush1.bf16.msra.mxu0 %v97
    %116 = vmatprep.subr.bf16.mxu0 0
    %117 = vmatpush1.bf16.msra.mxu0 %v98
    %118 = vmatprep.subr.bf16.mxu0 0
    %119 = vmatpush1.bf16.msra.mxu0 %v99
    %120 = vmatprep.subr.bf16.mxu0 0
    %121 = vmatpush1.bf16.msra.mxu0 %v100
    %122 = vmatprep.subr.bf16.mxu0 0
    %123 = vmatpush1.bf16.msra.mxu0 %v101
    %124 = vmatprep.subr.bf16.mxu0 0
    %125 = vmatpush1.bf16.msra.mxu0 %v102
    %126 = vmatprep.subr.bf16.mxu0 0
    %127 = vmatpush1.bf16.msra.mxu0 %v103
    %128 = vmatprep.subr.bf16.mxu0 0
    %129 = vmatpush1.bf16.msra.mxu0 0
    %130 = vmatprep.subr.bf16.mxu0 0
    %131 = vmatpush1.bf16.msra.mxu0 0
    %132 = vmatprep.subr.bf16.mxu0 0
    %133 = vmatpush1.bf16.msra.mxu0 0
    %134 = vmatprep.subr.bf16.mxu0 0
    %135 = vmatpush1.bf16.msra.mxu0 0
    %136 = vmatprep.subr.bf16.mxu0 0
    %137 = vmatpush1.bf16.msra.mxu0 0
    %138 = vmatprep.subr.bf16.mxu0 0
    %139 = vmatpush1.bf16.msra.mxu0 0
    %140 = vmatprep.subr.bf16.mxu0 0
    %141 = vmatpush1.bf16.msra.mxu0 0
    %142 = vmatprep.subr.bf16.mxu0 0
    %143 = vmatpush1.bf16.msra.mxu0 0
    %144 = vmatprep.mubr.bf16.mxu0 0
    %145 = vmatmul.mubr.bf16.gmra.mrb[0].mxu0 %v47
    %v146 = vpop.f32.mrb[0].mxu0
    %v147 = vadd.f32 0.0, %v146
    %v148 = vpop.f32.mrb[0].mxu0
    %v149 = vpop.f32.mrb[0].mxu0
    %v150 = vpop.f32.mrb[0].mxu0
    %151 = vdwg.mxu0
    %v152 = vmul.f32 %v147, %v147
    %v153 = vrot.slane %v147, 4
    %v154 = vadd.f32 %v147, %v153
    %v155 = vrot.slane %v154, 2
    %v156 = vadd.f32 %v154, %v155
    %v157 = vrot.slane %v156, 1
    %v158 = vadd.f32 %v156, %v157
    %v159 = vrot.slane %v152, 4
    %v160 = vadd.f32 %v152, %v159
    %v161 = vrot.slane %v160, 2
    %v162 = vadd.f32 %v160, %v161
    %v163 = vrot.slane %v162, 1
    %v164 = vadd.f32 %v162, %v163
    %v165 = vmul.f32 %v158, 0.125
    %v166 = vmul.f32 %v164, 0.125
    %v167 = vmul.f32 %v165, %v165
    %v168 = vsub.f32 %v166, %v167
    %v169 = vmax.f32 %v168, 0.0
    %v170 = vld [vmem:[%s3] sm:$0x1]
    %v171 = vadd.f32 %v169, 1e-05
    %v172 = vrsqrt.pop %v171
    %v173 = vmul.f32 %v170, %v172
    %v174 = vld [vmem:[%s3 + $0x1] sm:$0x1]
    %v175 = vmul.f32 %v165, %v173
    %v176 = vsub.f32 %v174, %v175
    %v177 = vlaneseq
    %v178 = vshrl.u32 %v177, 7
    %v179 = vsub.s32 0, %v178
    %v180 = vrot.slane %v173, %v179
    %v181 = vmul.f32 %v147, %v180
    %v182 = vlaneseq
    %v183 = vshrl.u32 %v182, 7
    %v184 = vsub.s32 0, %v183
    %v185 = vrot.slane %v176, %v184
    %v186 = vadd.f32 %v181, %v185
    %v187 = vmax.f32 %v186, 0.0
    %v188 = vpack.c.bf16 %v187, %v187
    %v189 = vld [vmem:[#allocation5] sm:$0xf]
    %v190 = vld [vmem:[#allocation5 + $0x4] sm:$0xf]
    %v191 = vld [vmem:[#allocation5 + $0x8] sm:$0xf]
    %v192 = vld [vmem:[#allocation5 + $0xc] sm:$0xf]
    %v193 = vld [vmem:[#allocation5 + $0x10] sm:$0xf]
    %v194 = vld [vmem:[#allocation5 + $0x14] sm:$0xf]
    %v195 = vld [vmem:[#allocation5 + $0x18] sm:$0xf]
    %v196 = vld [vmem:[#allocation5 + $0x1c] sm:$0xf]
    %v197 = vld [vmem:[#allocation5 + $0x20] sm:$0xf]
    %v198 = vld [vmem:[#allocation5 + $0x24] sm:$0xf]
    %v199 = vld [vmem:[#allocation5 + $0x28] sm:$0xf]
    %v200 = vld [vmem:[#allocation5 + $0x2c] sm:$0xf]
    %v201 = vld [vmem:[#allocation5 + $0x30] sm:$0xf]
    %v202 = vld [vmem:[#allocation5 + $0x34] sm:$0xf]
    %v203 = vld [vmem:[#allocation5 + $0x38] sm:$0xf]
    %v204 = vld [vmem:[#allocation5 + $0x3c] sm:$0xf]
    %v221 = vunpack.c.l.b16 %v189
    %v222 = vunpack.c.l.b16 %v190
    %v223 = vunpack.c.l.b16 %v191
    %v224 = vunpack.c.l.b16 %v192
    %v225 = vunpack.c.l.b16 %v193
    %v226 = vunpack.c.l.b16 %v194
    %v227 = vunpack.c.l.b16 %v195
    %v228 = vunpack.c.l.b16 %v196
    %v229 = vunpack.c.l.b16 %v197
    %v230 = vunpack.c.l.b16 %v198
    %v231 = vunpack.c.l.b16 %v199
    %v232 = vunpack.c.l.b16 %v200
    %v233 = vunpack.c.l.b16 %v201
    %v234 = vunpack.c.l.b16 %v202
    %v235 = vunpack.c.l.b16 %v203
    %v236 = vunpack.c.l.b16 %v204
    %v237 = vpack.c.b16 %v222, %v221
    %v238 = vpack.c.b16 %v224, %v223
    %v239 = vpack.c.b16 %v226, %v225
    %v240 = vpack.c.b16 %v228, %v227
    %v241 = vpack.c.b16 %v230, %v229
    %v242 = vpack.c.b16 %v232, %v231
    %v243 = vpack.c.b16 %v234, %v233
    %v244 = vpack.c.b16 %v236, %v235
    %253 = vmatprep.subr.bf16.mxu0 0
    %254 = vmatpush1.bf16.msra.mxu0 %v237
    %255 = vmatprep.subr.bf16.mxu0 0
    %256 = vmatpush1.bf16.msra.mxu0 %v238
    %257 = vmatprep.subr.bf16.mxu0 0
    %258 = vmatpush1.bf16.msra.mxu0 %v239
    %259 = vmatprep.subr.bf16.mxu0 0
    %260 = vmatpush1.bf16.msra.mxu0 %v240
    %261 = vmatprep.subr.bf16.mxu0 0
    %262 = vmatpush1.bf16.msra.mxu0 %v241
    %263 = vmatprep.subr.bf16.mxu0 0
    %264 = vmatpush1.bf16.msra.mxu0 %v242
    %265 = vmatprep.subr.bf16.mxu0 0
    %266 = vmatpush1.bf16.msra.mxu0 %v243
    %267 = vmatprep.subr.bf16.mxu0 0
    %268 = vmatpush1.bf16.msra.mxu0 %v244
    %269 = vmatprep.subr.bf16.mxu0 0
    %270 = vmatpush1.bf16.msra.mxu0 0
    %271 = vmatprep.subr.bf16.mxu0 0
    %272 = vmatpush1.bf16.msra.mxu0 0
    %273 = vmatprep.subr.bf16.mxu0 0
    %274 = vmatpush1.bf16.msra.mxu0 0
    %275 = vmatprep.subr.bf16.mxu0 0
    %276 = vmatpush1.bf16.msra.mxu0 0
    %277 = vmatprep.subr.bf16.mxu0 0
    %278 = vmatpush1.bf16.msra.mxu0 0
    %279 = vmatprep.subr.bf16.mxu0 0
    %280 = vmatpush1.bf16.msra.mxu0 0
    %281 = vmatprep.subr.bf16.mxu0 0
    %282 = vmatpush1.bf16.msra.mxu0 0
    %283 = vmatprep.subr.bf16.mxu0 0
    %284 = vmatpush1.bf16.msra.mxu0 0
    %285 = vmatprep.mubr.bf16.mxu0 0
    %286 = vmatmul.mubr.bf16.gmra.mrb[0].mxu0 %v188
    %v287 = vpop.f32.mrb[0].mxu0
    %v288 = vadd.f32 0.0, %v287
    %v289 = vpop.f32.mrb[0].mxu0
    %v290 = vpop.f32.mrb[0].mxu0
    %v291 = vpop.f32.mrb[0].mxu0
    %292 = vdwg.mxu0
    %v293 = vmul.f32 %v288, %v288
    %v294 = vrot.slane %v288, 4
    %v295 = vadd.f32 %v288, %v294
    %v296 = vrot.slane %v295, 2
    %v297 = vadd.f32 %v295, %v296
    %v298 = vrot.slane %v297, 1
    %v299 = vadd.f32 %v297, %v298
    %v300 = vrot.slane %v293, 4
    %v301 = vadd.f32 %v293, %v300
    %v302 = vrot.slane %v301, 2
    %v303 = vadd.f32 %v301, %v302
    %v304 = vrot.slane %v303, 1
    %v305 = vadd.f32 %v303, %v304
    %v306 = vmul.f32 %v299, 0.125
    %v307 = vmul.f32 %v305, 0.125
    %v308 = vmul.f32 %v306, %v306
    %v309 = vsub.f32 %v307, %v308
    %v310 = vmax.f32 %v309, 0.0
    %v311 = vld [vmem:[%s3 + $0x2] sm:$0x1]
    %v312 = vadd.f32 %v310, 1e-05
    %v313 = vrsqrt.pop %v312
    %v314 = vmul.f32 %v311, %v313
    %v315 = vld [vmem:[%s3 + $0x3] sm:$0x1]
    %v316 = vmul.f32 %v306, %v314
    %v317 = vsub.f32 %v315, %v316
    %v318 = vlaneseq
    %v319 = vshrl.u32 %v318, 7
    %v320 = vsub.s32 0, %v319
    %v321 = vrot.slane %v314, %v320
    %v322 = vmul.f32 %v288, %v321
    %v323 = vlaneseq
    %v324 = vshrl.u32 %v323, 7
    %v325 = vsub.s32 0, %v324
    %v326 = vrot.slane %v317, %v325
    %v327 = vadd.f32 %v322, %v326
    %v328 = vmax.f32 %v327, 0.0
    %v329 = vpack.c.bf16 %v328, %v328
    %s330 = scalar_lea.vmem [#allocation5], 64
    %v331 = vld [vmem:[%s330] sm:$0xf]
    %v332 = vld [vmem:[%s330 + $0x4] sm:$0xf]
    %v333 = vld [vmem:[%s330 + $0x8] sm:$0xf]
    %v334 = vld [vmem:[%s330 + $0xc] sm:$0xf]
    %v335 = vld [vmem:[%s330 + $0x10] sm:$0xf]
    %v336 = vld [vmem:[%s330 + $0x14] sm:$0xf]
    %v337 = vld [vmem:[%s330 + $0x18] sm:$0xf]
    %v338 = vld [vmem:[%s330 + $0x1c] sm:$0xf]
    %v339 = vld [vmem:[%s330 + $0x20] sm:$0xf]
    %v340 = vld [vmem:[%s330 + $0x24] sm:$0xf]
    %v341 = vld [vmem:[%s330 + $0x28] sm:$0xf]
    %v342 = vld [vmem:[%s330 + $0x2c] sm:$0xf]
    %v343 = vld [vmem:[%s330 + $0x30] sm:$0xf]
    %v344 = vld [vmem:[%s330 + $0x34] sm:$0xf]
    %v345 = vld [vmem:[%s330 + $0x38] sm:$0xf]
    %v346 = vld [vmem:[%s330 + $0x3c] sm:$0xf]
    %v347 = vld [vmem:[%s3 + $0x4] sm:$0x1]
    %v348 = vlaneseq
    %v349 = vshrl.u32 %v348, 7
    %v350 = vsub.s32 0, %v349
    %v351 = vrot.slane %v347, %v350
    %v368 = vunpack.c.l.b16 %v331
    %v369 = vunpack.c.l.b16 %v332
    %v370 = vunpack.c.l.b16 %v333
    %v371 = vunpack.c.l.b16 %v334
    %v372 = vunpack.c.l.b16 %v335
    %v373 = vunpack.c.l.b16 %v336
    %v374 = vunpack.c.l.b16 %v337
    %v375 = vunpack.c.l.b16 %v338
    %v376 = vunpack.c.l.b16 %v339
    %v377 = vunpack.c.l.b16 %v340
    %v378 = vunpack.c.l.b16 %v341
    %v379 = vunpack.c.l.b16 %v342
    %v380 = vunpack.c.l.b16 %v343
    %v381 = vunpack.c.l.b16 %v344
    %v382 = vunpack.c.l.b16 %v345
    %v383 = vunpack.c.l.b16 %v346
    %v384 = vpack.c.b16 %v369, %v368
    %v385 = vpack.c.b16 %v371, %v370
    %v386 = vpack.c.b16 %v373, %v372
    %v387 = vpack.c.b16 %v375, %v374
    %v388 = vpack.c.b16 %v377, %v376
    %v389 = vpack.c.b16 %v379, %v378
    %v390 = vpack.c.b16 %v381, %v380
    %v391 = vpack.c.b16 %v383, %v382
    %400 = vmatprep.subr.bf16.mxu0 0
    %401 = vmatpush1.bf16.msra.mxu0 %v384
    %402 = vmatprep.subr.bf16.mxu0 0
    %403 = vmatpush1.bf16.msra.mxu0 %v385
    %404 = vmatprep.subr.bf16.mxu0 0
    %405 = vmatpush1.bf16.msra.mxu0 %v386
    %406 = vmatprep.subr.bf16.mxu0 0
    %407 = vmatpush1.bf16.msra.mxu0 %v387
    %408 = vmatprep.subr.bf16.mxu0 0
    %409 = vmatpush1.bf16.msra.mxu0 %v388
    %410 = vmatprep.subr.bf16.mxu0 0
    %411 = vmatpush1.bf16.msra.mxu0 %v389
    %412 = vmatprep.subr.bf16.mxu0 0
    %413 = vmatpush1.bf16.msra.mxu0 %v390
    %414 = vmatprep.subr.bf16.mxu0 0
    %415 = vmatpush1.bf16.msra.mxu0 %v391
    %416 = vmatprep.subr.bf16.mxu0 0
    %417 = vmatpush1.bf16.msra.mxu0 0
    %418 = vmatprep.subr.bf16.mxu0 0
    %419 = vmatpush1.bf16.msra.mxu0 0
    %420 = vmatprep.subr.bf16.mxu0 0
    %421 = vmatpush1.bf16.msra.mxu0 0
    %422 = vmatprep.subr.bf16.mxu0 0
    %423 = vmatpush1.bf16.msra.mxu0 0
    %424 = vmatprep.subr.bf16.mxu0 0
    %425 = vmatpush1.bf16.msra.mxu0 0
    %426 = vmatprep.subr.bf16.mxu0 0
    %427 = vmatpush1.bf16.msra.mxu0 0
    %428 = vmatprep.subr.bf16.mxu0 0
    %429 = vmatpush1.bf16.msra.mxu0 0
    %430 = vmatprep.subr.bf16.mxu0 0
    %431 = vmatpush1.bf16.msra.mxu0 0
    %432 = vmatprep.mubr.bf16.mxu0 0
    %433 = vmatmul.mubr.bf16.gmra.mrb[0].mxu0 %v329
    %v434 = vpop.f32.mrb[0].mxu0
    %v435 = vadd.f32 %v351, %v434
    %v436 = vpop.f32.mrb[0].mxu0
    %v437 = vpop.f32.mrb[0].mxu0
    %v438 = vpop.f32.mrb[0].mxu0
    %439 = vdwg.mxu0
    %440 = vst [vmem:[#allocation7] sm:$0xff] %v435
    // Predicated region
    $region26: #{mlp_forward.1} parent=1 // pred_check
      _
    $region27: #{mlp_forward.1} parent=1 // pred_check_branch
      %442 = sbr.rel (0) target = $region29
    $region28: #{mlp_forward.1} parent=1 // pred_region
      %s444 = ssub.s32 128, 128
      %445 = vsyncadd [#allocation4], %s444
      %s447 = sshll.u32 [#allocation7], 4
      %s448 = int_to_ptr.vmem [resolvable:$true] %s447
      %450 = dma.vmem_to_hbm [thread:$0]  %s448, 128, %s4, [#allocation4]
    $region29: #{mlp_forward.1} parent=1 // pred_fallthru
      _
    // Predicated region
    $region30: #{mlp_forward.1} parent=1 // pred_check
      _
    $region31: #{mlp_forward.1} parent=1 // pred_check_branch
      %452 = sbr.rel (0) target = $region33
    $region32: #{mlp_forward.1} parent=1 // pred_region
      %453 = dma.done [#allocation4], 128
    $region33: #{mlp_forward.1} parent=1 // pred_fallthru
      _
    %454 = vsyncpa [#allocation3], 1
    %455 = vsyncpa [#allocation6], 1
    %456 = vsyncpa [#allocation4], 1

</llo_original>
